<compile_context>
chip_gen: v7x
topology: tpu7x:2x2x1
jax: 0.10.0
libtpu: 0.0.40
codegen_flags: <defaults>
</compile_context>

<pallas_src>
import functools

import jax
import jax.numpy as jnp
from jax import lax
from jax.experimental import pallas as pl
from jax.experimental.pallas import tpu as pltpu


def _ceil_div(a, b):
    return -(-a // b)


@functools.lru_cache(maxsize=None)
def _hw_budgets():
    """(tile_budget_bytes, vmem_limit_bytes), generation-aware."""
    vmem_cap = None
    try:
        vmem_cap = int(pltpu.get_tpu_info().vmem_capacity_bytes)
    except Exception:
        vmem_cap = None
    if vmem_cap is None:
        try:
            kind = jax.devices()[0].device_kind.lower()
        except Exception:
            kind = ""
        # v7x: 64 MiB VMEM per TensorCore; v5e/v6e: 128 MiB.
        vmem_cap = 64 * 1024 * 1024 if "v7" in kind else 128 * 1024 * 1024
    if vmem_cap >= 100 * 1024 * 1024:          # v5e / v6e (128 MiB VMEM)
        return 48 * 1024 * 1024, 96 * 1024 * 1024
    return 20 * 1024 * 1024, 48 * 1024 * 1024  # v7x (64 MiB VMEM), conservative


@functools.lru_cache(maxsize=None)
def _is_v5e():
    try:
        kind = jax.devices()[0].device_kind.lower()
    except Exception:
        return False
    return ("v5" in kind) and ("lite" in kind or "v5e" in kind)


def _pick_tk(c, hw, dtype_bytes, tile_budget):
    """128-aligned HW tile so 2 (double-buffer) * C * TK * bytes fits the budget."""
    tk_budget = (tile_budget // (2 * c * dtype_bytes)) // 128 * 128
    tk_budget = max(tk_budget, 128)
    # No point making TK larger than one half of HW (rounded up to 128).
    tk_need = _ceil_div(_ceil_div(hw, 2), 128) * 128
    return max(128, min(tk_budget, tk_need))


# ---------------------------------------------------------------------------
# Kernel: tiled partial Gram.  grid = (2, n_k); output block (C, C) per half.
# ---------------------------------------------------------------------------
def _make_gram_kernel(cast_bf16):
    def kernel(x_ref, g_ref):
        @pl.when(pl.program_id(1) == 0)
        def _():
            g_ref[...] = jnp.zeros_like(g_ref)

        x = x_ref[...]                       # (C, TK), operand dtype preserved
        if cast_bf16:                        # v5e large-C f32: MXU-bound relief
            x = x.astype(jnp.bfloat16)
        g_ref[...] += lax.dot_general(
            x, x,
            dimension_numbers=(((1,), (1,)), ((), ())),   # X @ X^T, no transpose
            preferred_element_type=jnp.float32,
        )

    return kernel


# ---------------------------------------------------------------------------
# Host-side wrappers (jitted; shapes static per trace).
# ---------------------------------------------------------------------------
@jax.jit
def _gram_partials(x2d):
    c, hw = x2d.shape
    tile_budget, vmem_limit = _hw_budgets()
    tk = _pick_tk(c, hw, x2d.dtype.itemsize, tile_budget)
    n_k = _ceil_div(_ceil_div(hw, 2), tk)
    hw_pad = 2 * n_k * tk
    if hw_pad != hw:
        # Zero columns do not change X @ X^T -> exact.
        x2d = jnp.pad(x2d, ((0, 0), (0, hw_pad - hw)))

    cast_bf16 = bool(_is_v5e() and x2d.dtype == jnp.float32 and c >= 512)
    kernel = _make_gram_kernel(cast_bf16)

    return pl.pallas_call(
        kernel,
        out_shape=jax.ShapeDtypeStruct((2, c, c), jnp.float32),
        grid=(2, n_k),
        in_specs=[pl.BlockSpec((c, tk), lambda i, k: (0, i * n_k + k))],
        out_specs=pl.BlockSpec((None, c, c), lambda i, k: (i, 0, 0)),
        compiler_params=pltpu.CompilerParams(
            dimension_semantics=("parallel", "arbitrary"),
            vmem_limit_bytes=vmem_limit,
        ),
        cost_estimate=pl.CostEstimate(
            flops=2 * c * c * hw_pad,
            transcendentals=0,
            bytes_accessed=c * hw_pad * x2d.dtype.itemsize + 2 * c * c * 4,
        ),
    )(x2d)


@jax.jit
def _gram_2d(x2d):
    return jnp.sum(_gram_partials(x2d), axis=0)


@jax.jit
def _style_loss_2d(x2d, target):
    g = jnp.sum(_gram_partials(x2d), axis=0)
    loss = jnp.mean(jnp.square(g - target))   # mse_loss(G, target), mean over C*C
    return g, loss


def gram_matrix(feature_nchw):
    """feature_nchw: (1, C, H, W) -> (C, C) float32 Gram matrix (un-normalized)."""
    n, c, h, w = feature_nchw.shape
    assert n == 1, "gram_matrix (PyTorch .view(d, h*w)) assumes batch == 1"
    return _gram_2d(feature_nchw.reshape(c, h * w))


class StyleLoss:
    """JAX/Pallas port of the PyTorch StyleLoss module."""

    def __init__(self, target_feature):
        # target Gram computed once at construction ("detached" constant)
        self.target = jax.block_until_ready(gram_matrix(target_feature))
        self.loss_value = None
        self.G = None

    def __call__(self, input_nchw):
        n, c, h, w = input_nchw.shape
        assert n == 1
        g, loss = _style_loss_2d(input_nchw.reshape(c, h * w), self.target)
        self.G = g
        self.loss_value = loss
        # module returns its input unchanged
        return input_nchw


# ---------------------------------------------------------------------------
if __name__ == "__main__":
    key = jax.random.PRNGKey(0)
    k_tgt, k_in = jax.random.split(key)

    # batch=1 is required by the module's .view(d, h*w); channels=4, spatial=16x16
    # -> HW=256, exercising the 2-way split with one 128-lane tile per half.
    C, H, W = 4, 16, 16
    target_feature = jax.random.normal(k_tgt, (1, C, H, W), dtype=jnp.float32)
    input_feature = jax.random.normal(k_in, (1, C, H, W), dtype=jnp.float32)

    style = StyleLoss(target_feature)
    out = style(input_feature)
    jax.block_until_ready(out)
    jax.block_until_ready(style.loss_value)
    jax.block_until_ready(style.G)

    # Reference check (plain JAX) to make sure semantics match the PyTorch spec.
    def ref_gram(t):
        _, d, h, w = t.shape
        x = t.reshape(d, h * w).astype(jnp.float32)
        return x @ x.T

    G_ref = ref_gram(input_feature)
    T_ref = ref_gram(target_feature)
    loss_ref = jnp.mean((G_ref - T_ref) ** 2)

    assert jnp.allclose(out, input_feature), "forward must return input unchanged"
    assert jnp.allclose(style.target, T_ref, rtol=1e-5, atol=1e-5)
    assert jnp.allclose(style.G, G_ref, rtol=1e-5, atol=1e-5)
    assert jnp.allclose(style.loss_value, loss_ref, rtol=1e-5, atol=1e-5)

    print("KERNEL_OK")
</pallas_src>

<mosaic_0001>
module attributes {stable_mosaic.version = 11 : i64} {
  func.func @kernel(%arg0: i32, %arg1: i32, %arg2: memref<4x128xf32, #tpu.memory_space<vmem>>, %arg3: memref<1x4x4xf32, #tpu.memory_space<vmem>>) attributes {dimension_semantics = [#tpu.dimension_semantics<parallel>, #tpu.dimension_semantics<arbitrary>], iteration_bounds = array<i64: 2, 1>, scalar_prefetch = 0 : i64, scratch_operands = 0 : i64, tpu.core_type = #tpu.core_type<tc>, window_params = [{transform_indices = @transform_0, window_bounds = array<i64: 4, 128>}, {transform_indices = @transform_1, window_bounds = array<i64: 1, 4, 4>}]} {
    %c0_i32 = arith.constant 0 : i32
    %0 = arith.cmpi eq, %arg1, %c0_i32 : i32
    %1 = arith.extui %0 : i1 to i32
    %c0_i32_0 = arith.constant 0 : i32
    %2 = arith.cmpi ne, %1, %c0_i32_0 : i32
    scf.if %2 {
      %cst_8 = arith.constant 0.000000e+00 : f32
      %11 = vector.broadcast %cst_8 : f32 to vector<4x4xf32>
      %c0_9 = arith.constant 0 : index
      %c0_10 = arith.constant 0 : index
      %c0_11 = arith.constant 0 : index
      %12 = vector.load %arg3[%c0_9, %c0_10, %c0_11] : memref<1x4x4xf32, #tpu.memory_space<vmem>>, vector<1x4x4xf32>
      %13 = vector.shape_cast %12 : vector<1x4x4xf32> to vector<4x4xf32>
      %14 = vector.shape_cast %11 : vector<4x4xf32> to vector<1x4x4xf32>
      tpu.vector_store %arg3[%c0_9, %c0_10, %c0_11], %14 {strides = array<i32>} : memref<1x4x4xf32, #tpu.memory_space<vmem>>, vector<1x4x4xf32>,
    } else {
    }
    %c0 = arith.constant 0 : index
    %c0_1 = arith.constant 0 : index
    %3 = vector.load %arg2[%c0, %c0_1] : memref<4x128xf32, #tpu.memory_space<vmem>>, vector<4x128xf32>
    %c0_2 = arith.constant 0 : index
    %c0_3 = arith.constant 0 : index
    %c0_4 = arith.constant 0 : index
    %4 = vector.load %arg3[%c0_2, %c0_3, %c0_4] : memref<1x4x4xf32, #tpu.memory_space<vmem>>, vector<1x4x4xf32>
    %5 = vector.shape_cast %4 : vector<1x4x4xf32> to vector<4x4xf32>
    %cst = arith.constant dense<0.000000e+00> : vector<4x4xf32>
    %6 = tpu.matmul %3, %3, %cst {dimension_numbers = #tpu.dot_dimension_numbers<[1], [1], [0], [0], [0, 0, 1, 0], [], []>} : vector<4x128xf32>, vector<4x128xf32>, vector<4x4xf32> -> vector<4x4xf32>
    %7 = arith.addf %5, %6 : vector<4x4xf32>
    %c0_5 = arith.constant 0 : index
    %c0_6 = arith.constant 0 : index
    %c0_7 = arith.constant 0 : index
    %8 = vector.load %arg3[%c0_5, %c0_6, %c0_7] : memref<1x4x4xf32, #tpu.memory_space<vmem>>, vector<1x4x4xf32>
    %9 = vector.shape_cast %8 : vector<1x4x4xf32> to vector<4x4xf32>
    %10 = vector.shape_cast %7 : vector<4x4xf32> to vector<1x4x4xf32>
    tpu.vector_store %arg3[%c0_5, %c0_6, %c0_7], %10 {strides = array<i32>} : memref<1x4x4xf32, #tpu.memory_space<vmem>>, vector<1x4x4xf32>,
    return
  }
  func.func @transform_0(%arg0: i32, %arg1: i32) -> (i32, i32) {
    %c1_i32 = arith.constant 1 : i32
    %0 = arith.muli %arg0, %c1_i32 : i32
    %1 = arith.addi %0, %arg1 : i32
    %c0_i32 = arith.constant 0 : i32
    %c0_i32_0 = arith.constant 0 : i32
    return %c0_i32, %1 : i32, i32
  }
  func.func @transform_1(%arg0: i32, %arg1: i32) -> (i32, i32, i32) {
    %c0_i32 = arith.constant 0 : i32
    %c0_i32_0 = arith.constant 0 : i32
    %c0_i32_1 = arith.constant 0 : i32
    return %arg0, %c0_i32, %c0_i32_0 : i32, i32, i32
  }
}

</mosaic_0001>

<llo_original>
// kernel: _gram_partials.1
$region0: #{_gram_partials.1}
  #allocation0 [shape = 'u32[]', space=smem, size = 0x4, offset = 0x4, fixed_abs, tag = 'smem constant byte address 0x4 - core index']
  #allocation1 [shape = 'u32[144,128]{1,0:T(1,128)}', space=vmem, size = 0x12000, scoped, tag = 'internal scratch']
  %s0 = inlined_call_operand.hbm [shape: f32[4,256], index: 0, kind: input, shape index: {}]
  %s1 = inlined_call_operand.hbm [shape: f32[2,4,4], index: 1, kind: output, shape index: {}]
  %s2 = sld [smem:[#allocation0]]
  $region45: #{_gram_partials.1} parent=0
    _
  %s4 = ssub.s32 1, %s2
  %s5 = scalar_select 0, %s4, %s2
  $region1: #{_gram_partials.1} parent=0
    #allocation2 [shape = 'u8[4096]{0}', space=vmem, size = 0x1000, scoped, tag = 'input window, operand 0']
    #allocation3 [shape = 's32[2]{0}', space=sflag, size = 0x8, scoped, tag = 'scoped memory for _gram_partials.1']
    #allocation4 [shape = 's32[2]{0}', space=sflag, size = 0x8, scoped, tag = 'scoped memory for _gram_partials.1']
    #allocation5 [shape = 'u8[4096]{0}', space=vmem, size = 0x1000, scoped, tag = 'output window, operand 0']
    %6 = vsyncpa [#allocation3], 0
    %s7 = scalar_lea.sflag [#allocation3], 1
    %8 = vsyncpa %s7, 0
    %9 = vsyncpa [#allocation4], 0
    %s10 = scalar_lea.sflag [#allocation4], 1
    %11 = vsyncpa %s10, 0
    loop: start=0, step=1, limit=4
    $region2: #{_gram_partials.1} parent=1 // loop_pre_header
      _
    $region3: #{_gram_partials.1} parent=1 // loop_header
      %s13 = sphi 0, %s17
      %p14 = scmp.ge.s32.totalorder %s13, 4
      %s20 = sphi 0, %s32
      %s21 = sphi 0, %s28
      %s22 = sphi 0, %s20
      %s23 = sphi 0, %s21
      %s24 = sphi 0, %s22
      %s25 = sphi 0, %s23
      %s37 = sphi 0, %s39
      %s40 = sphi 0, %s37
      %s41 = sphi 0, %s40
      %s57 = sphi 0, %s41
      %s63 = sphi 0, %s65
      %s66 = sphi 0, %s63
      %s67 = sphi 0, %s66
      %s83 = sphi 0, %s67
    $region4: #{_gram_partials.1} parent=1 // loop_header_branch
      %16 = sbr.rel (%p14) target = $region8
    $region5: #{_gram_partials.1} parent=1 // loop_body
      %s18 = ssub.s32 %s13, 1
      %s19 = ssub.s32 %s13, 2
      %s26 = sadd.s32 1, %s21
      %p27 = scmp.ge.s32.totalorder %s26, 1
      %s28 = scalar_select %p27, 0, %s26
      %s29 = sadd.s32 1, %s20
      %s30 = scalar_select %p27, %s29, %s20
      %p31 = scmp.ge.s32.totalorder %s30, 2
      %s32 = scalar_select %p31, 0, %s30
      %s33 = sadd.s32 %s20, %s21
      %s34 = sadd.s32 %s32, %s28
      %s35 = ssub.s32 %s33, %s34
      %p36 = scmp.eq.s32.totalorder %s35, 0
      %s38 = sadd.s32 %s37, 1
      %s39 = scalar_select %p36, %s37, %s38
      %p42 = pneg %p36
      %p43 = scmp.eq.s32.totalorder %s13, 1
      %p44 = por %p42, %p43
      %p45 = scmp.ne.s32.totalorder %s37, %s40
      %p46 = scmp.eq.s32.totalorder %s13, 0
      %p47 = por %p45, %p46
      %p48 = scmp.ne.s32.totalorder %s37, %s40
      %p49 = scmp.eq.s32.totalorder %s18, 1
      %p50 = por %p48, %p49
      %p51 = scmp.ne.s32.totalorder %s40, %s41
      %p52 = scmp.eq.s32.totalorder %s18, 0
      %p53 = por %p51, %p52
      %p54 = scmp.ne.s32.totalorder %s40, %s41
      %p55 = scmp.eq.s32.totalorder %s19, 1
      %p56 = por %p54, %p55
      %p58 = scmp.ne.s32.totalorder %s41, %s57
      %p59 = scmp.eq.s32.totalorder %s19, 0
      %p60 = por %p58, %p59
      %s61 = ssub.s32 %s20, %s32
      %p62 = scmp.eq.s32.totalorder %s61, 0
      %s64 = sadd.s32 %s63, 1
      %s65 = scalar_select %p62, %s63, %s64
      %p68 = pneg %p62
      %p69 = scmp.eq.s32.totalorder %s13, 1
      %p70 = por %p68, %p69
      %p71 = scmp.ne.s32.totalorder %s63, %s66
      %p72 = scmp.eq.s32.totalorder %s13, 0
      %p73 = por %p71, %p72
      %p74 = scmp.ne.s32.totalorder %s63, %s66
      %p75 = scmp.eq.s32.totalorder %s18, 1
      %p76 = por %p74, %p75
      %p77 = scmp.ne.s32.totalorder %s66, %s67
      %p78 = scmp.eq.s32.totalorder %s18, 0
      %p79 = por %p77, %p78
      %p80 = scmp.ne.s32.totalorder %s66, %s67
      %p81 = scmp.eq.s32.totalorder %s19, 1
      %p82 = por %p80, %p81
      %p84 = scmp.ne.s32.totalorder %s67, %s83
      %p85 = scmp.eq.s32.totalorder %s19, 0
      %p86 = por %p84, %p85
      %p87 = scmp.le.s32.totalorder 1, %s13
      %p88 = scmp.lt.s32.totalorder %s13, 3
      %p89 = pnand %p87, %p88
      %p90 = pneg %p89
      // Predicated region
      $region9: #{_gram_partials.1} parent=5 // pred_check
        _
      $region10: #{_gram_partials.1} parent=5 // pred_check_branch
        %92 = sbr.rel (%p89) target = $region12
      $region11: #{_gram_partials.1} parent=5 // pred_region
        %s93 = ssub.s32 %s13, 1
      $region12: #{_gram_partials.1} parent=5 // pred_fallthru
        _
      %p94 = scmp.lt.s32.totalorder %s13, 2
      // Predicated region
      $region13: #{_gram_partials.1} parent=5 // pred_check
        %p95 = pneg %p94
      $region14: #{_gram_partials.1} parent=5 // pred_check_branch
        %97 = sbr.rel (%p95) target = $region16
      $region15: #{_gram_partials.1} parent=5 // pred_region
        // Predicated region
        $region17: #{_gram_partials.1} parent=15 // pred_check
          %p98 = pneg %p47
        $region18: #{_gram_partials.1} parent=15 // pred_check_branch
          %100 = sbr.rel (%p98) target = $region20
        $region19: #{_gram_partials.1} parent=15 // pred_region
          %s101 = sand.u32 %s37, 1
          %s102 = scalar_lea.sflag [#allocation3], %s101
          %s103 = sand.u32 %s37, 1
          %s104 = smul.addr %s103, 4
          %s105 = scalar_lea.vmem [#allocation2], %s104
          %s106 = sadd.s32 %s20, %s21
          %s108 = ssub.s32 64, 64
          %109 = vsyncadd %s102, %s108
          %s110 = smul.addr %s106, 64
          %s111 = scalar_lea.hbm %s0, %s110
          %s113 = sshll.u32 %s105, 4
          %s114 = int_to_ptr.vmem [resolvable:$true] %s113
          %116 = dma.hbm_to_vmem [thread:$0]  %s111, 64, %s114, %s102
        $region20: #{_gram_partials.1} parent=15 // pred_fallthru
          _
      $region16: #{_gram_partials.1} parent=5 // pred_fallthru
        _
      %p117 = scmp.le.s32.totalorder 1, %s13
      %p118 = scmp.lt.s32.totalorder %s13, 3
      %p119 = pnand %p117, %p118
      %p120 = pneg %p119
      // Predicated region
      $region21: #{_gram_partials.1} parent=5 // pred_check
        _
      $region22: #{_gram_partials.1} parent=5 // pred_check_branch
        %122 = sbr.rel (%p119) target = $region24
      $region23: #{_gram_partials.1} parent=5 // pred_region
        %s123 = ssub.s32 %s13, 1
        %s124 = sand.u32 %s40, 1
        %s125 = scalar_lea.sflag [#allocation3], %s124
        %s126 = sand.u32 %s40, 1
        %s127 = smul.addr %s126, 4
        %s128 = scalar_lea.vmem [#allocation2], %s127
        // Predicated region
        $region25: #{_gram_partials.1} parent=23 // pred_check
          %p129 = pneg %p53
        $region26: #{_gram_partials.1} parent=23 // pred_check_branch
          %131 = sbr.rel (%p129) target = $region28
        $region27: #{_gram_partials.1} parent=23 // pred_region
          %132 = dma.done %s125, 64
        $region28: #{_gram_partials.1} parent=23 // pred_fallthru
          _
        %s133 = sand.u32 %s40, 1
        %s134 = scalar_lea.sflag [#allocation3], %s133
        %s135 = sand.u32 %s40, 1
        %s136 = smul.addr %s135, 4
        %s137 = scalar_lea.vmem [#allocation2], %s136
        %p138 = pneg %p53
        %p139 = pneg %p50
        %p140 = pneg %p79
        %p141 = pneg %p76
        %s142 = sand.u32 %s66, 1
        %s143 = scalar_lea.sflag [#allocation4], %s142
        %s144 = sand.u32 %s66, 1
        %s145 = smul.addr %s144, 4
        %s146 = scalar_lea.vmem [#allocation5], %s145
        %s147 = sadd.s32 %s22, %s23
        %p148 = scmp.eq.s32.totalorder %s23, 0
        // Predicated region
        $region29: #{_gram_partials.1} parent=23 // pred_check
          %p149 = pneg %p148
        $region30: #{_gram_partials.1} parent=23 // pred_check_branch
          %151 = sbr.rel (%p149) target = $region32
        $region31: #{_gram_partials.1} parent=23 // pred_region
          %vm152 = vcmask 27648
          %153 = vst.msk [vmem:[%s146] sm:$0xf] %vm152, 0.0
        $region32: #{_gram_partials.1} parent=23 // pred_fallthru
          _
        %v154 = vld [vmem:[%s128] sm:$0xf]
        %v155 = vld [vmem:[%s146] sm:$0xf]
        %156 = vmatprep.subr.mxu0 0.0
        %157 = vmatpush1.xpose.msra.mxu0 %v154
        %158 = vmatprep.subr.mxu0 0.0
        %159 = vmatpush1.xpose.msra.mxu0 0.0
        %160 = vmatprep.subr.mxu0 0.0
        %161 = vmatpush1.xpose.msra.mxu0 0.0
        %162 = vmatprep.subr.mxu0 0.0
        %163 = vmatpush1.xpose.msra.mxu0 0.0
        %164 = vmatprep.subr.mxu0 0.0
        %165 = vmatpush1.xpose.msra.mxu0 0.0
        %166 = vmatprep.subr.mxu0 0.0
        %167 = vmatpush1.xpose.msra.mxu0 0.0
        %168 = vmatprep.subr.mxu0 0.0
        %169 = vmatpush1.xpose.msra.mxu0 0.0
        %170 = vmatprep.subr.mxu0 0.0
        %171 = vmatpush1.xpose.msra.mxu0 0.0
        %172 = vmatprep.subr.mxu0 0.0
        %173 = vmatpush1.xpose.msra.mxu0 0.0
        %174 = vmatprep.subr.mxu0 0.0
        %175 = vmatpush1.xpose.msra.mxu0 0.0
        %176 = vmatprep.subr.mxu0 0.0
        %177 = vmatpush1.xpose.msra.mxu0 0.0
        %178 = vmatprep.subr.mxu0 0.0
        %179 = vmatpush1.xpose.msra.mxu0 0.0
        %180 = vmatprep.subr.mxu0 0.0
        %181 = vmatpush1.xpose.msra.mxu0 0.0
        %182 = vmatprep.subr.mxu0 0.0
        %183 = vmatpush1.xpose.msra.mxu0 0.0
        %184 = vmatprep.subr.mxu0 0.0
        %185 = vmatpush1.xpose.msra.mxu0 0.0
        %186 = vmatprep.subr.mxu0 0.0
        %187 = vmatpush1.xpose.msra.mxu0 0.0
        %188 = vmatprep.subr.mxu0 0.0
        %189 = vmatpush1.xpose.msra.mxu0 0.0
        %190 = vmatprep.subr.mxu0 0.0
        %191 = vmatpush1.xpose.msra.mxu0 0.0
        %192 = vmatprep.subr.mxu0 0.0
        %193 = vmatpush1.xpose.msra.mxu0 0.0
        %194 = vmatprep.subr.mxu0 0.0
        %195 = vmatpush1.xpose.msra.mxu0 0.0
        %196 = vmatprep.subr.mxu0 0.0
        %197 = vmatpush1.xpose.msra.mxu0 0.0
        %198 = vmatprep.subr.mxu0 0.0
        %199 = vmatpush1.xpose.msra.mxu0 0.0
        %200 = vmatprep.subr.mxu0 0.0
        %201 = vmatpush1.xpose.msra.mxu0 0.0
        %202 = vmatprep.subr.mxu0 0.0
        %203 = vmatpush1.xpose.msra.mxu0 0.0
        %204 = vmatprep.subr.mxu0 0.0
        %205 = vmatpush1.xpose.msra.mxu0 0.0
        %206 = vmatprep.subr.mxu0 0.0
        %207 = vmatpush1.xpose.msra.mxu0 0.0
        %208 = vmatprep.subr.mxu0 0.0
        %209 = vmatpush1.xpose.msra.mxu0 0.0
        %210 = vmatprep.subr.mxu0 0.0
        %211 = vmatpush1.xpose.msra.mxu0 0.0
        %212 = vmatprep.subr.mxu0 0.0
        %213 = vmatpush1.xpose.msra.mxu0 0.0
        %214 = vmatprep.subr.mxu0 0.0
        %215 = vmatpush1.xpose.msra.mxu0 0.0
        %216 = vmatprep.subr.mxu0 0.0
        %217 = vmatpush1.xpose.msra.mxu0 0.0
        %218 = vmatprep.subr.mxu0 0.0
        %219 = vmatpush1.xpose.msra.mxu0 0.0
        %220 = vmatprep.mubr.f32.mxu0 0.0
        %221 = vmatmul.mubr.f32.gmra.mrb[0].mxu0 %v154
        %v222 = vpop.f32.mrb[0].mxu0
        %v223 = vadd.f32 0.0, %v222
        %v224 = vpop.f32.mrb[0].mxu0
        %225 = vdwg.mxu0
        %v226 = vadd.f32 %v155, %v223
        %vm227 = vcmask 27648
        %228 = vst.msk [vmem:[%s146] sm:$0xf] %vm227, %v226
        %s229 = sand.u32 %s66, 1
        %s230 = scalar_lea.sflag [#allocation4], %s229
        %s231 = sand.u32 %s66, 1
        %s232 = smul.addr %s231, 4
        %s233 = scalar_lea.vmem [#allocation5], %s232
        // Predicated region
        $region33: #{_gram_partials.1} parent=23 // pred_check
          %p234 = pneg %p76
        $region34: #{_gram_partials.1} parent=23 // pred_check_branch
          %236 = sbr.rel (%p234) target = $region36
        $region35: #{_gram_partials.1} parent=23 // pred_region
          %s238 = ssub.s32 64, 64
          %239 = vsyncadd %s230, %s238
          %s240 = smul.addr %s22, 64
          %s241 = scalar_lea.hbm %s1, %s240
          %s243 = sshll.u32 %s233, 4
          %s244 = int_to_ptr.vmem [resolvable:$true] %s243
          %246 = dma.vmem_to_hbm [thread:$0]  %s244, 64, %s241, %s230
        $region36: #{_gram_partials.1} parent=23 // pred_fallthru
          _
      $region24: #{_gram_partials.1} parent=5 // pred_fallthru
        _
      %p247 = scmp.le.s32.totalorder 2, %s13
      // Predicated region
      $region37: #{_gram_partials.1} parent=5 // pred_check
        %p248 = pneg %p247
      $region38: #{_gram_partials.1} parent=5 // pred_check_branch
        %250 = sbr.rel (%p248) target = $region40
      $region39: #{_gram_partials.1} parent=5 // pred_region
        %s251 = ssub.s32 %s13, 2
        // Predicated region
        $region41: #{_gram_partials.1} parent=39 // pred_check
          %p252 = pneg %p82
        $region42: #{_gram_partials.1} parent=39 // pred_check_branch
          %254 = sbr.rel (%p252) target = $region44
        $region43: #{_gram_partials.1} parent=39 // pred_region
          %s255 = sand.u32 %s67, 1
          %s256 = scalar_lea.sflag [#allocation4], %s255
          %s257 = sand.u32 %s67, 1
          %s258 = smul.addr %s257, 4
          %s259 = scalar_lea.vmem [#allocation5], %s258
          %260 = dma.done %s256, 64
        $region44: #{_gram_partials.1} parent=39 // pred_fallthru
          _
      $region40: #{_gram_partials.1} parent=5 // pred_fallthru
        _
    $region6: #{_gram_partials.1} parent=1 // loop_footer
      %s17 = sadd.s32 1, %s13
    $region7: #{_gram_partials.1} parent=1 // loop_footer_branch
      %12 = sbr.rel target = $region3
    $region8: #{_gram_partials.1} parent=1 // loop_exit
      _
    %261 = vsyncpa [#allocation3], 1
    %s262 = scalar_lea.sflag [#allocation3], 1
    %263 = vsyncpa %s262, 1
    %264 = vsyncpa [#allocation4], 1
    %s265 = scalar_lea.sflag [#allocation4], 1
    %266 = vsyncpa %s265, 1

</llo_original>
